<compile_context>
chip_gen: v7x
topology: tpu7x:2x2x1
jax: 0.10.0
libtpu: 0.0.40
codegen_flags: <defaults>
</compile_context>

<pallas_src>
import functools
import math

import jax
import jax.numpy as jnp
from jax.experimental import pallas as pl
from jax.experimental.pallas import tpu as pltpu


# ---------------------------------------------------------------------------
# Fused Bottleneck kernel
# ---------------------------------------------------------------------------

def _bottleneck_kernel(x_ref, w1_ref, t1_ref, wd_ref, t2_ref, w3_ref, osh_ref,
                       o_ref, h1_scr, *, stride, pad, lout, has_res):
    """conv1(1x1) -> +shift -> ReLU6 -> depthwise(k=3) -> +shift -> ReLU6
    -> conv3(1x1) -> +shift (+ residual).  Everything stays in VMEM/vregs."""
    L = x_ref.shape[0]
    x = x_ref[...]                                            # (L, Cin) f32

    # conv1 (BN scale pre-folded into w1), bf16 MXU inputs, f32 accumulate.
    h1 = jnp.dot(x.astype(jnp.bfloat16), w1_ref[...],
                 preferred_element_type=jnp.float32)          # (L, Ce)
    h1 = jnp.clip(h1 + t1_ref[...], 0.0, 6.0)                 # BN(b0)+ReLU6

    # Stage h1 with a zero halo of `pad` rows in VMEM scratch (never to HBM).
    h1_scr[...] = jnp.zeros_like(h1_scr)
    h1_scr[pl.ds(pad, L), :] = h1

    # Depthwise 3-tap conv (BN scale folded into wd): taps are (strided)
    # sublane loads from the scratch ref -> no tap arrays in HBM.
    wd = wd_ref[...]                                          # (3, Ce)

    def tap(t):
        if stride == 1:
            return h1_scr[pl.ds(t, lout), :]
        return h1_scr[pl.ds(t, lout, stride), :]

    h2 = tap(0) * wd[0:1, :] + tap(1) * wd[1:2, :] + tap(2) * wd[2:3, :]
    h2 = jnp.clip(h2 + t2_ref[...], 0.0, 6.0)                 # BN(b1)+ReLU6

    # conv3 (optional trailing-BN scale folded into w3) + shift (+ residual).
    out = jnp.dot(h2.astype(jnp.bfloat16), w3_ref[...],
                  preferred_element_type=jnp.float32)         # (Lout, Cout)
    out = out + osh_ref[...]
    if has_res:
        # TODO(synk): Dropout before the residual add is eval-mode identity.
        out = out + x
    o_ref[...] = out.astype(o_ref.dtype)


def apply_bottleneck(p, x, stride, pad):
    """x: (N, L, Cin) channels-last -> (N, Lout, Cout)."""
    n, L, cin = x.shape
    ce = p['w1'].shape[1]
    cout = p['w3'].shape[1]
    lout = (L + 2 * pad - 3) // stride + 1
    # PyTorch only adds the residual for stride==1 (and needs Cin==Cout).
    has_res = (stride == 1) and (cin == cout)

    kern = functools.partial(_bottleneck_kernel, stride=stride, pad=pad,
                             lout=lout, has_res=has_res)
    vce = pl.BlockSpec((1, ce), lambda i: (0, 0))
    call = pl.pallas_call(
        kern,
        out_shape=jax.ShapeDtypeStruct((n, lout, cout), jnp.float32),
        grid_spec=pltpu.PrefetchScalarGridSpec(
            num_scalar_prefetch=0,
            # One sample per grid step; "parallel" lets v7x's 2 TensorCores
            # split the batch.  Blocks equal full array dims -> no padding.
            grid=(n,),
            in_specs=[
                pl.BlockSpec((None, L, cin), lambda i: (i, 0, 0)),   # x
                pl.BlockSpec((cin, ce), lambda i: (0, 0)),           # w1 (bf16)
                vce,                                                 # shift1
                pl.BlockSpec((3, ce), lambda i: (0, 0)),             # wd (f32)
                vce,                                                 # shift2
                pl.BlockSpec((ce, cout), lambda i: (0, 0)),          # w3 (bf16)
                pl.BlockSpec((1, cout), lambda i: (0, 0)),           # out shift
            ],
            out_specs=pl.BlockSpec((None, lout, cout), lambda i: (i, 0, 0)),
            scratch_shapes=[pltpu.VMEM((L + 2 * pad, ce), jnp.float32)],
        ),
        compiler_params=pltpu.CompilerParams(
            dimension_semantics=("parallel",)),
    )
    return call(x, p['w1'], p['t1'], p['wd'], p['t2'], p['w3'], p['osh'])


def mbconv_forward(params, cfg, tail_affine, x_ncl):
    """x_ncl: (N, C, L) PyTorch layout. Returns (N, C_out, L_out)."""
    x = jnp.transpose(x_ncl, (0, 2, 1)).astype(jnp.float32)   # NCL -> NLC
    for p, (stride, pad) in zip(params, cfg):
        x = apply_bottleneck(p, x, stride, pad)
    if tail_affine is not None:
        # Trailing BN could not be folded (last block had a residual):
        # apply it after the residual add, exactly as PyTorch does.
        s, t = tail_affine
        x = x * s[None, None, :] + t[None, None, :]
    return jnp.transpose(x, (0, 2, 1))                        # NLC -> NCL


# ---------------------------------------------------------------------------
# Parameter construction (deterministic, synthetic, eval-mode BN folding)
# ---------------------------------------------------------------------------

class KeyGen:
    def __init__(self, seed):
        self._key = jax.random.PRNGKey(seed)

    def __call__(self):
        self._key, k = jax.random.split(self._key)
        return k


def init_conv1d(key, cin, cout):
    k1, k2 = jax.random.split(key)
    std = math.sqrt(2.0 / cin)
    w = jax.random.normal(k1, (cin, cout), jnp.float32) * std
    b = jax.random.normal(k2, (cout,), jnp.float32) * 0.02
    return w, b


def init_dwconv(key, c, ksize=3):
    k1, k2 = jax.random.split(key)
    std = math.sqrt(2.0 / ksize)
    w = jax.random.normal(k1, (ksize, c), jnp.float32) * std
    b = jax.random.normal(k2, (c,), jnp.float32) * 0.02
    return w, b


def init_bn(key, c, eps=1e-5):
    k1, k2, k3, k4 = jax.random.split(key, 4)
    gamma = 1.0 + 0.1 * jax.random.normal(k1, (c,), jnp.float32)
    beta = 0.05 * jax.random.normal(k2, (c,), jnp.float32)
    mean = 0.05 * jax.random.normal(k3, (c,), jnp.float32)
    var = 1.0 + 0.1 * jax.random.uniform(k4, (c,), jnp.float32)
    scale = gamma / jnp.sqrt(var + eps)
    shift = beta - mean * scale
    return scale, shift


def make_bottleneck(kg, cin, cout, expansion):
    ce = cin * expansion
    w1, b1c = init_conv1d(kg(), cin, ce)          # conv1 (1x1)
    s0, sh0 = init_bn(kg(), ce)                   # b0
    wd, bd = init_dwconv(kg(), ce, 3)             # conv2 (depthwise, k=3)
    s1, sh1 = init_bn(kg(), ce)                   # b1
    w3, b3 = init_conv1d(kg(), ce, cout)          # conv3 (1x1)
    return dict(
        # BN scales folded into weights; conv biases folded into the shifts.
        w1=(w1 * s0[None, :]).astype(jnp.bfloat16),
        t1=(sh0 + b1c * s0).reshape(1, ce),
        wd=wd * s1[None, :],
        t2=(sh1 + bd * s1).reshape(1, ce),
        w3=w3,                                    # f32 until trailing-BN fold
        b3=b3,
    )


def build_mbconv(seed, in_channel, out_channels, expansion, layers, stride=2):
    kg = KeyGen(seed)
    params, cfg = [], []
    for _ in range(layers - 1):
        params.append(make_bottleneck(kg, in_channel, in_channel, expansion))
        cfg.append((1, 1))                        # (stride, padding)
    params.append(make_bottleneck(kg, in_channel, out_channels, expansion))
    cfg.append((stride, 1))

    # MBConv's trailing BatchNorm1d.
    bn_s, bn_sh = init_bn(kg(), out_channels)
    last = params[-1]
    tail_affine = None
    if cfg[-1][0] != 1:
        # Last block has no residual -> legal to fold bn into conv3 epilogue.
        last['w3'] = last['w3'] * bn_s[None, :]
        last['osh'] = (bn_sh + last['b3'] * bn_s).reshape(1, out_channels)
    else:
        # Residual active on the last block: bn must run AFTER the add.
        last['osh'] = last['b3'].reshape(1, out_channels)
        tail_affine = (bn_s, bn_sh)

    for p in params:
        if 'osh' not in p:
            p['osh'] = p['b3'].reshape(1, p['w3'].shape[1])
        p['w3'] = p['w3'].astype(jnp.bfloat16)
        del p['b3']
    return params, tuple(cfg), tail_affine


# ---------------------------------------------------------------------------
# Main
# ---------------------------------------------------------------------------

if __name__ == "__main__":
    batch, in_channel, seq = 2, 4, 16
    expansion, layers, out_channels, stride = 2, 2, 8, 2

    key = jax.random.PRNGKey(0)
    x = jax.random.normal(key, (batch, in_channel, seq), jnp.float32)

    params, cfg, tail = build_mbconv(seed=0, in_channel=in_channel,
                                     out_channels=out_channels,
                                     expansion=expansion, layers=layers,
                                     stride=stride)

    @jax.jit
    def run(inp):
        return mbconv_forward(params, cfg, tail, inp)

    out = jax.block_until_ready(run(x))

    lout = (seq + 2 - 3) // stride + 1
    assert out.shape == (batch, out_channels, lout), out.shape
    assert bool(jnp.all(jnp.isfinite(out)))
    print("KERNEL_OK")
</pallas_src>

<mosaic_0001>
module attributes {stable_mosaic.version = 11 : i64} {
  func.func @_bottleneck_kernel(%arg0: i32, %arg1: memref<1x16x4xf32, #tpu.memory_space<vmem>>, %arg2: memref<4x8xbf16, #tpu.memory_space<vmem>>, %arg3: memref<1x8xf32, #tpu.memory_space<vmem>>, %arg4: memref<3x8xf32, #tpu.memory_space<vmem>>, %arg5: memref<1x8xf32, #tpu.memory_space<vmem>>, %arg6: memref<8x8xbf16, #tpu.memory_space<vmem>>, %arg7: memref<1x8xf32, #tpu.memory_space<vmem>>, %arg8: memref<1x8x8xf32, #tpu.memory_space<vmem>>, %arg9: memref<18x8xf32, #tpu.memory_space<vmem>>) attributes {dimension_semantics = [#tpu.dimension_semantics<parallel>], iteration_bounds = array<i64: 2>, scalar_prefetch = 0 : i64, scratch_operands = 1 : i64, tpu.core_type = #tpu.core_type<tc>, window_params = [{transform_indices = @transform_0, window_bounds = array<i64: 1, 16, 4>}, {pipeline_mode = #tpu.pipeline_mode<synchronous>, transform_indices = @transform_1, window_bounds = array<i64: 4, 8>}, {pipeline_mode = #tpu.pipeline_mode<synchronous>, transform_indices = @transform_2, window_bounds = array<i64: 1, 8>}, {pipeline_mode = #tpu.pipeline_mode<synchronous>, transform_indices = @transform_3, window_bounds = array<i64: 3, 8>}, {pipeline_mode = #tpu.pipeline_mode<synchronous>, transform_indices = @transform_4, window_bounds = array<i64: 1, 8>}, {pipeline_mode = #tpu.pipeline_mode<synchronous>, transform_indices = @transform_5, window_bounds = array<i64: 8, 8>}, {pipeline_mode = #tpu.pipeline_mode<synchronous>, transform_indices = @transform_6, window_bounds = array<i64: 1, 8>}, {transform_indices = @transform_7, window_bounds = array<i64: 1, 8, 8>}]} {
    %c0 = arith.constant 0 : index
    %c0_0 = arith.constant 0 : index
    %c0_1 = arith.constant 0 : index
    %0 = vector.load %arg1[%c0, %c0_0, %c0_1] : memref<1x16x4xf32, #tpu.memory_space<vmem>>, vector<1x16x4xf32>
    %1 = vector.shape_cast %0 : vector<1x16x4xf32> to vector<16x4xf32>
    %2 = arith.truncf %1 : vector<16x4xf32> to vector<16x4xbf16>
    %c0_2 = arith.constant 0 : index
    %c0_3 = arith.constant 0 : index
    %3 = vector.load %arg2[%c0_2, %c0_3] : memref<4x8xbf16, #tpu.memory_space<vmem>>, vector<4x8xbf16>
    %cst = arith.constant dense<0.000000e+00> : vector<16x8xf32>
    %4 = tpu.matmul %2, %3, %cst {dimension_numbers = #tpu.dot_dimension_numbers<[1], [0], [0], [1], [0, 0, 1, 1], [], []>} : vector<16x4xbf16>, vector<4x8xbf16>, vector<16x8xf32> -> vector<16x8xf32>
    %c0_4 = arith.constant 0 : index
    %c0_5 = arith.constant 0 : index
    %5 = vector.load %arg3[%c0_4, %c0_5] : memref<1x8xf32, #tpu.memory_space<vmem>>, vector<1x8xf32>
    %6 = vector.broadcast %5 : vector<1x8xf32> to vector<16x8xf32>
    %7 = arith.addf %4, %6 : vector<16x8xf32>
    %cst_6 = arith.constant 0.000000e+00 : f32
    %cst_7 = arith.constant 6.000000e+00 : f32
    %8 = vector.broadcast %cst_6 : f32 to vector<16x8xf32>
    %9 = arith.maximumf %8, %7 : vector<16x8xf32>
    %10 = vector.broadcast %cst_7 : f32 to vector<16x8xf32>
    %11 = arith.minimumf %10, %9 : vector<16x8xf32>
    %cst_8 = arith.constant 0.000000e+00 : f32
    %12 = vector.broadcast %cst_8 : f32 to vector<18x8xf32>
    %c0_9 = arith.constant 0 : index
    %c0_10 = arith.constant 0 : index
    %13 = vector.load %arg9[%c0_9, %c0_10] : memref<18x8xf32, #tpu.memory_space<vmem>>, vector<18x8xf32>
    tpu.vector_store %arg9[%c0_9, %c0_10], %12 {strides = array<i32>} : memref<18x8xf32, #tpu.memory_space<vmem>>, vector<18x8xf32>,
    %c1 = arith.constant 1 : index
    %c0_11 = arith.constant 0 : index
    %14 = vector.load %arg9[%c1, %c0_11] : memref<18x8xf32, #tpu.memory_space<vmem>>, vector<16x8xf32>
    tpu.vector_store %arg9[%c1, %c0_11], %11 {strides = array<i32>} : memref<18x8xf32, #tpu.memory_space<vmem>>, vector<16x8xf32>,
    %c0_12 = arith.constant 0 : index
    %c0_13 = arith.constant 0 : index
    %15 = vector.load %arg4[%c0_12, %c0_13] : memref<3x8xf32, #tpu.memory_space<vmem>>, vector<3x8xf32>
    %c0_14 = arith.constant 0 : index
    %c0_15 = arith.constant 0 : index
    %16 = tpu.strided_load %arg9[%c0_14, %c0_15] {strides = array<i32: 2, 1>} : memref<18x8xf32, #tpu.memory_space<vmem>>, vector<8x8xf32>
    %17 = vector.extract_strided_slice %15 {offsets = [0, 0], sizes = [1, 8], strides = [1, 1]} : vector<3x8xf32> to vector<1x8xf32>
    %18 = vector.broadcast %17 : vector<1x8xf32> to vector<8x8xf32>
    %19 = arith.mulf %16, %18 : vector<8x8xf32>
    %c1_16 = arith.constant 1 : index
    %c0_17 = arith.constant 0 : index
    %20 = tpu.strided_load %arg9[%c1_16, %c0_17] {strides = array<i32: 2, 1>} : memref<18x8xf32, #tpu.memory_space<vmem>>, vector<8x8xf32>
    %21 = vector.extract_strided_slice %15 {offsets = [1, 0], sizes = [1, 8], strides = [1, 1]} : vector<3x8xf32> to vector<1x8xf32>
    %22 = vector.broadcast %21 : vector<1x8xf32> to vector<8x8xf32>
    %23 = arith.mulf %20, %22 : vector<8x8xf32>
    %24 = arith.addf %19, %23 : vector<8x8xf32>
    %c2 = arith.constant 2 : index
    %c0_18 = arith.constant 0 : index
    %25 = tpu.strided_load %arg9[%c2, %c0_18] {strides = array<i32: 2, 1>} : memref<18x8xf32, #tpu.memory_space<vmem>>, vector<8x8xf32>
    %26 = vector.extract_strided_slice %15 {offsets = [2, 0], sizes = [1, 8], strides = [1, 1]} : vector<3x8xf32> to vector<1x8xf32>
    %27 = vector.broadcast %26 : vector<1x8xf32> to vector<8x8xf32>
    %28 = arith.mulf %25, %27 : vector<8x8xf32>
    %29 = arith.addf %24, %28 : vector<8x8xf32>
    %c0_19 = arith.constant 0 : index
    %c0_20 = arith.constant 0 : index
    %30 = vector.load %arg5[%c0_19, %c0_20] : memref<1x8xf32, #tpu.memory_space<vmem>>, vector<1x8xf32>
    %31 = vector.broadcast %30 : vector<1x8xf32> to vector<8x8xf32>
    %32 = arith.addf %29, %31 : vector<8x8xf32>
    %cst_21 = arith.constant 0.000000e+00 : f32
    %cst_22 = arith.constant 6.000000e+00 : f32
    %33 = vector.broadcast %cst_21 : f32 to vector<8x8xf32>
    %34 = arith.maximumf %33, %32 : vector<8x8xf32>
    %35 = vector.broadcast %cst_22 : f32 to vector<8x8xf32>
    %36 = arith.minimumf %35, %34 : vector<8x8xf32>
    %37 = arith.truncf %36 : vector<8x8xf32> to vector<8x8xbf16>
    %c0_23 = arith.constant 0 : index
    %c0_24 = arith.constant 0 : index
    %38 = vector.load %arg6[%c0_23, %c0_24] : memref<8x8xbf16, #tpu.memory_space<vmem>>, vector<8x8xbf16>
    %cst_25 = arith.constant dense<0.000000e+00> : vector<8x8xf32>
    %39 = tpu.matmul %37, %38, %cst_25 {dimension_numbers = #tpu.dot_dimension_numbers<[1], [0], [0], [1], [0, 0, 1, 1], [], []>} : vector<8x8xbf16>, vector<8x8xbf16>, vector<8x8xf32> -> vector<8x8xf32>
    %c0_26 = arith.constant 0 : index
    %c0_27 = arith.constant 0 : index
    %40 = vector.load %arg7[%c0_26, %c0_27] : memref<1x8xf32, #tpu.memory_space<vmem>>, vector<1x8xf32>
    %41 = vector.broadcast %40 : vector<1x8xf32> to vector<8x8xf32>
    %42 = arith.addf %39, %41 : vector<8x8xf32>
    %c0_28 = arith.constant 0 : index
    %c0_29 = arith.constant 0 : index
    %c0_30 = arith.constant 0 : index
    %43 = vector.load %arg8[%c0_28, %c0_29, %c0_30] : memref<1x8x8xf32, #tpu.memory_space<vmem>>, vector<1x8x8xf32>
    %44 = vector.shape_cast %43 : vector<1x8x8xf32> to vector<8x8xf32>
    %45 = vector.shape_cast %42 : vector<8x8xf32> to vector<1x8x8xf32>
    tpu.vector_store %arg8[%c0_28, %c0_29, %c0_30], %45 {strides = array<i32>} : memref<1x8x8xf32, #tpu.memory_space<vmem>>, vector<1x8x8xf32>,
    return
  }
  func.func @transform_0(%arg0: i32) -> (i32, i32, i32) {
    %c0_i32 = arith.constant 0 : i32
    %c0_i32_0 = arith.constant 0 : i32
    %c0_i32_1 = arith.constant 0 : i32
    return %arg0, %c0_i32, %c0_i32_0 : i32, i32, i32
  }
  func.func @transform_1(%arg0: i32) -> (i32, i32) {
    %c0_i32 = arith.constant 0 : i32
    %c0_i32_0 = arith.constant 0 : i32
    %c0_i32_1 = arith.constant 0 : i32
    return %c0_i32, %c0_i32_0 : i32, i32
  }
  func.func @transform_2(%arg0: i32) -> (i32, i32) {
    %c0_i32 = arith.constant 0 : i32
    %c0_i32_0 = arith.constant 0 : i32
    %c0_i32_1 = arith.constant 0 : i32
    return %c0_i32, %c0_i32_0 : i32, i32
  }
  func.func @transform_3(%arg0: i32) -> (i32, i32) {
    %c0_i32 = arith.constant 0 : i32
    %c0_i32_0 = arith.constant 0 : i32
    %c0_i32_1 = arith.constant 0 : i32
    return %c0_i32, %c0_i32_0 : i32, i32
  }
  func.func @transform_4(%arg0: i32) -> (i32, i32) {
    %c0_i32 = arith.constant 0 : i32
    %c0_i32_0 = arith.constant 0 : i32
    %c0_i32_1 = arith.constant 0 : i32
    return %c0_i32, %c0_i32_0 : i32, i32
  }
  func.func @transform_5(%arg0: i32) -> (i32, i32) {
    %c0_i32 = arith.constant 0 : i32
    %c0_i32_0 = arith.constant 0 : i32
    %c0_i32_1 = arith.constant 0 : i32
    return %c0_i32, %c0_i32_0 : i32, i32
  }
  func.func @transform_6(%arg0: i32) -> (i32, i32) {
    %c0_i32 = arith.constant 0 : i32
    %c0_i32_0 = arith.constant 0 : i32
    %c0_i32_1 = arith.constant 0 : i32
    return %c0_i32, %c0_i32_0 : i32, i32
  }
  func.func @transform_7(%arg0: i32) -> (i32, i32, i32) {
    %c0_i32 = arith.constant 0 : i32
    %c0_i32_0 = arith.constant 0 : i32
    %c0_i32_1 = arith.constant 0 : i32
    return %arg0, %c0_i32, %c0_i32_0 : i32, i32, i32
  }
}

module attributes {stable_mosaic.version = 11 : i64} {
  func.func @_bottleneck_kernel(%arg0: i32, %arg1: memref<1x16x4xf32, #tpu.memory_space<vmem>>, %arg2: memref<4x8xbf16, #tpu.memory_space<vmem>>, %arg3: memref<1x8xf32, #tpu.memory_space<vmem>>, %arg4: memref<3x8xf32, #tpu.memory_space<vmem>>, %arg5: memref<1x8xf32, #tpu.memory_space<vmem>>, %arg6: memref<8x4xbf16, #tpu.memory_space<vmem>>, %arg7: memref<1x4xf32, #tpu.memory_space<vmem>>, %arg8: memref<1x16x4xf32, #tpu.memory_space<vmem>>, %arg9: memref<18x8xf32, #tpu.memory_space<vmem>>) attributes {dimension_semantics = [#tpu.dimension_semantics<parallel>], iteration_bounds = array<i64: 2>, scalar_prefetch = 0 : i64, scratch_operands = 1 : i64, tpu.core_type = #tpu.core_type<tc>, window_params = [{transform_indices = @transform_0, window_bounds = array<i64: 1, 16, 4>}, {pipeline_mode = #tpu.pipeline_mode<synchronous>, transform_indices = @transform_1, window_bounds = array<i64: 4, 8>}, {pipeline_mode = #tpu.pipeline_mode<synchronous>, transform_indices = @transform_2, window_bounds = array<i64: 1, 8>}, {pipeline_mode = #tpu.pipeline_mode<synchronous>, transform_indices = @transform_3, window_bounds = array<i64: 3, 8>}, {pipeline_mode = #tpu.pipeline_mode<synchronous>, transform_indices = @transform_4, window_bounds = array<i64: 1, 8>}, {pipeline_mode = #tpu.pipeline_mode<synchronous>, transform_indices = @transform_5, window_bounds = array<i64: 8, 4>}, {pipeline_mode = #tpu.pipeline_mode<synchronous>, transform_indices = @transform_6, window_bounds = array<i64: 1, 4>}, {transform_indices = @transform_7, window_bounds = array<i64: 1, 16, 4>}]} {
    %c0 = arith.constant 0 : index
    %c0_0 = arith.constant 0 : index
    %c0_1 = arith.constant 0 : index
    %0 = vector.load %arg1[%c0, %c0_0, %c0_1] : memref<1x16x4xf32, #tpu.memory_space<vmem>>, vector<1x16x4xf32>
    %1 = vector.shape_cast %0 : vector<1x16x4xf32> to vector<16x4xf32>
    %2 = arith.truncf %1 : vector<16x4xf32> to vector<16x4xbf16>
    %c0_2 = arith.constant 0 : index
    %c0_3 = arith.constant 0 : index
    %3 = vector.load %arg2[%c0_2, %c0_3] : memref<4x8xbf16, #tpu.memory_space<vmem>>, vector<4x8xbf16>
    %cst = arith.constant dense<0.000000e+00> : vector<16x8xf32>
    %4 = tpu.matmul %2, %3, %cst {dimension_numbers = #tpu.dot_dimension_numbers<[1], [0], [0], [1], [0, 0, 1, 1], [], []>} : vector<16x4xbf16>, vector<4x8xbf16>, vector<16x8xf32> -> vector<16x8xf32>
    %c0_4 = arith.constant 0 : index
    %c0_5 = arith.constant 0 : index
    %5 = vector.load %arg3[%c0_4, %c0_5] : memref<1x8xf32, #tpu.memory_space<vmem>>, vector<1x8xf32>
    %6 = vector.broadcast %5 : vector<1x8xf32> to vector<16x8xf32>
    %7 = arith.addf %4, %6 : vector<16x8xf32>
    %cst_6 = arith.constant 0.000000e+00 : f32
    %cst_7 = arith.constant 6.000000e+00 : f32
    %8 = vector.broadcast %cst_6 : f32 to vector<16x8xf32>
    %9 = arith.maximumf %8, %7 : vector<16x8xf32>
    %10 = vector.broadcast %cst_7 : f32 to vector<16x8xf32>
    %11 = arith.minimumf %10, %9 : vector<16x8xf32>
    %cst_8 = arith.constant 0.000000e+00 : f32
    %12 = vector.broadcast %cst_8 : f32 to vector<18x8xf32>
    %c0_9 = arith.constant 0 : index
    %c0_10 = arith.constant 0 : index
    %13 = vector.load %arg9[%c0_9, %c0_10] : memref<18x8xf32, #tpu.memory_space<vmem>>, vector<18x8xf32>
    tpu.vector_store %arg9[%c0_9, %c0_10], %12 {strides = array<i32>} : memref<18x8xf32, #tpu.memory_space<vmem>>, vector<18x8xf32>,
    %c1 = arith.constant 1 : index
    %c0_11 = arith.constant 0 : index
    %14 = vector.load %arg9[%c1, %c0_11] : memref<18x8xf32, #tpu.memory_space<vmem>>, vector<16x8xf32>
    tpu.vector_store %arg9[%c1, %c0_11], %11 {strides = array<i32>} : memref<18x8xf32, #tpu.memory_space<vmem>>, vector<16x8xf32>,
    %c0_12 = arith.constant 0 : index
    %c0_13 = arith.constant 0 : index
    %15 = vector.load %arg4[%c0_12, %c0_13] : memref<3x8xf32, #tpu.memory_space<vmem>>, vector<3x8xf32>
    %c0_14 = arith.constant 0 : index
    %c0_15 = arith.constant 0 : index
    %16 = vector.load %arg9[%c0_14, %c0_15] : memref<18x8xf32, #tpu.memory_space<vmem>>, vector<16x8xf32>
    %17 = vector.extract_strided_slice %15 {offsets = [0, 0], sizes = [1, 8], strides = [1, 1]} : vector<3x8xf32> to vector<1x8xf32>
    %18 = vector.broadcast %17 : vector<1x8xf32> to vector<16x8xf32>
    %19 = arith.mulf %16, %18 : vector<16x8xf32>
    %c1_16 = arith.constant 1 : index
    %c0_17 = arith.constant 0 : index
    %20 = vector.load %arg9[%c1_16, %c0_17] : memref<18x8xf32, #tpu.memory_space<vmem>>, vector<16x8xf32>
    %21 = vector.extract_strided_slice %15 {offsets = [1, 0], sizes = [1, 8], strides = [1, 1]} : vector<3x8xf32> to vector<1x8xf32>
    %22 = vector.broadcast %21 : vector<1x8xf32> to vector<16x8xf32>
    %23 = arith.mulf %20, %22 : vector<16x8xf32>
    %24 = arith.addf %19, %23 : vector<16x8xf32>
    %c2 = arith.constant 2 : index
    %c0_18 = arith.constant 0 : index
    %25 = vector.load %arg9[%c2, %c0_18] : memref<18x8xf32, #tpu.memory_space<vmem>>, vector<16x8xf32>
    %26 = vector.extract_strided_slice %15 {offsets = [2, 0], sizes = [1, 8], strides = [1, 1]} : vector<3x8xf32> to vector<1x8xf32>
    %27 = vector.broadcast %26 : vector<1x8xf32> to vector<16x8xf32>
    %28 = arith.mulf %25, %27 : vector<16x8xf32>
    %29 = arith.addf %24, %28 : vector<16x8xf32>
    %c0_19 = arith.constant 0 : index
    %c0_20 = arith.constant 0 : index
    %30 = vector.load %arg5[%c0_19, %c0_20] : memref<1x8xf32, #tpu.memory_space<vmem>>, vector<1x8xf32>
    %31 = vector.broadcast %30 : vector<1x8xf32> to vector<16x8xf32>
    %32 = arith.addf %29, %31 : vector<16x8xf32>
    %cst_21 = arith.constant 0.000000e+00 : f32
    %cst_22 = arith.constant 6.000000e+00 : f32
    %33 = vector.broadcast %cst_21 : f32 to vector<16x8xf32>
    %34 = arith.maximumf %33, %32 : vector<16x8xf32>
    %35 = vector.broadcast %cst_22 : f32 to vector<16x8xf32>
    %36 = arith.minimumf %35, %34 : vector<16x8xf32>
    %37 = arith.truncf %36 : vector<16x8xf32> to vector<16x8xbf16>
    %c0_23 = arith.constant 0 : index
    %c0_24 = arith.constant 0 : index
    %38 = vector.load %arg6[%c0_23, %c0_24] : memref<8x4xbf16, #tpu.memory_space<vmem>>, vector<8x4xbf16>
    %cst_25 = arith.constant dense<0.000000e+00> : vector<16x4xf32>
    %39 = tpu.matmul %37, %38, %cst_25 {dimension_numbers = #tpu.dot_dimension_numbers<[1], [0], [0], [1], [0, 0, 1, 1], [], []>} : vector<16x8xbf16>, vector<8x4xbf16>, vector<16x4xf32> -> vector<16x4xf32>
    %c0_26 = arith.constant 0 : index
    %c0_27 = arith.constant 0 : index
    %40 = vector.load %arg7[%c0_26, %c0_27] : memref<1x4xf32, #tpu.memory_space<vmem>>, vector<1x4xf32>
    %41 = vector.broadcast %40 : vector<1x4xf32> to vector<16x4xf32>
    %42 = arith.addf %39, %41 : vector<16x4xf32>
    %43 = arith.addf %42, %1 : vector<16x4xf32>
    %c0_28 = arith.constant 0 : index
    %c0_29 = arith.constant 0 : index
    %c0_30 = arith.constant 0 : index
    %44 = vector.load %arg8[%c0_28, %c0_29, %c0_30] : memref<1x16x4xf32, #tpu.memory_space<vmem>>, vector<1x16x4xf32>
    %45 = vector.shape_cast %44 : vector<1x16x4xf32> to vector<16x4xf32>
    %46 = vector.shape_cast %43 : vector<16x4xf32> to vector<1x16x4xf32>
    tpu.vector_store %arg8[%c0_28, %c0_29, %c0_30], %46 {strides = array<i32>} : memref<1x16x4xf32, #tpu.memory_space<vmem>>, vector<1x16x4xf32>,
    return
  }
  func.func @transform_0(%arg0: i32) -> (i32, i32, i32) {
    %c0_i32 = arith.constant 0 : i32
    %c0_i32_0 = arith.constant 0 : i32
    %c0_i32_1 = arith.constant 0 : i32
    return %arg0, %c0_i32, %c0_i32_0 : i32, i32, i32
  }
  func.func @transform_1(%arg0: i32) -> (i32, i32) {
    %c0_i32 = arith.constant 0 : i32
    %c0_i32_0 = arith.constant 0 : i32
    %c0_i32_1 = arith.constant 0 : i32
    return %c0_i32, %c0_i32_0 : i32, i32
  }
  func.func @transform_2(%arg0: i32) -> (i32, i32) {
    %c0_i32 = arith.constant 0 : i32
    %c0_i32_0 = arith.constant 0 : i32
    %c0_i32_1 = arith.constant 0 : i32
    return %c0_i32, %c0_i32_0 : i32, i32
  }
  func.func @transform_3(%arg0: i32) -> (i32, i32) {
    %c0_i32 = arith.constant 0 : i32
    %c0_i32_0 = arith.constant 0 : i32
    %c0_i32_1 = arith.constant 0 : i32
    return %c0_i32, %c0_i32_0 : i32, i32
  }
  func.func @transform_4(%arg0: i32) -> (i32, i32) {
    %c0_i32 = arith.constant 0 : i32
    %c0_i32_0 = arith.constant 0 : i32
    %c0_i32_1 = arith.constant 0 : i32
    return %c0_i32, %c0_i32_0 : i32, i32
  }
  func.func @transform_5(%arg0: i32) -> (i32, i32) {
    %c0_i32 = arith.constant 0 : i32
    %c0_i32_0 = arith.constant 0 : i32
    %c0_i32_1 = arith.constant 0 : i32
    return %c0_i32, %c0_i32_0 : i32, i32
  }
  func.func @transform_6(%arg0: i32) -> (i32, i32) {
    %c0_i32 = arith.constant 0 : i32
    %c0_i32_0 = arith.constant 0 : i32
    %c0_i32_1 = arith.constant 0 : i32
    return %c0_i32, %c0_i32_0 : i32, i32
  }
  func.func @transform_7(%arg0: i32) -> (i32, i32, i32) {
    %c0_i32 = arith.constant 0 : i32
    %c0_i32_0 = arith.constant 0 : i32
    %c0_i32_1 = arith.constant 0 : i32
    return %arg0, %c0_i32, %c0_i32_0 : i32, i32, i32
  }
}

</mosaic_0001>

<llo_original>
// kernel: run.3
$region0: #{run.3}
  #allocation0 [shape = 'u32[]', space=smem, size = 0x4, offset = 0x4, fixed_abs, tag = 'smem constant byte address 0x4 - core index']
  #allocation1 [shape = 'u32[144,128]{1,0:T(1,128)}', space=vmem, size = 0x12000, scoped, tag = 'internal scratch']
  #allocation2 [shape = 'f32[18,8]{1,0:T(8,128)}', space=vmem, size = 0x3000, scoped, tag = 'scratch operand']
  %s0 = inlined_call_operand.vmem [shape: f32[2,16,4], index: 0, kind: input, shape index: {}]
  %s1 = inlined_call_operand.vmem [shape: bf16[4,8], index: 1, kind: input, shape index: {}]
  %s2 = inlined_call_operand.vmem [shape: f32[1,8], index: 2, kind: input, shape index: {}]
  %s3 = inlined_call_operand.vmem [shape: f32[3,8], index: 3, kind: input, shape index: {}]
  %s4 = inlined_call_operand.vmem [shape: f32[1,8], index: 4, kind: input, shape index: {}]
  %s5 = inlined_call_operand.vmem [shape: bf16[8,8], index: 5, kind: input, shape index: {}]
  %s6 = inlined_call_operand.vmem [shape: f32[1,8], index: 6, kind: input, shape index: {}]
  %s7 = inlined_call_operand.vmem [shape: f32[2,8,8], index: 7, kind: output, shape index: {}]
  %s8 = sld [smem:[#allocation0]]
  $region61: #{run.3} parent=0
    _
  %s10 = ssub.s32 1, %s8
  %s11 = scalar_select 0, %s10, %s8
  loop: start=0, step=1, limit=4
  $region2: #{run.3} parent=0 // loop_pre_header
    _
  $region3: #{run.3} parent=0 // loop_header
    %s13 = sphi 0, %s17
    %p14 = scmp.ge.s32.totalorder %s13, 4
    %s23 = sphi 0, %s25
    %s26 = sphi 0, %s23
    %s27 = sphi 0, %s26
    %s43 = sphi 0, %s27
    %s47 = sphi 0, %s47
    %s49 = sphi 0, %s47
    %s50 = sphi 0, %s49
    %s64 = sphi 0, %s50
    %s68 = sphi 0, %s68
    %s70 = sphi 0, %s68
    %s71 = sphi 0, %s70
    %s85 = sphi 0, %s71
    %s89 = sphi 0, %s89
    %s91 = sphi 0, %s89
    %s92 = sphi 0, %s91
    %s106 = sphi 0, %s92
    %s110 = sphi 0, %s110
    %s112 = sphi 0, %s110
    %s113 = sphi 0, %s112
    %s127 = sphi 0, %s113
    %s131 = sphi 0, %s131
    %s133 = sphi 0, %s131
    %s134 = sphi 0, %s133
    %s148 = sphi 0, %s134
    %s152 = sphi 0, %s152
    %s154 = sphi 0, %s152
    %s155 = sphi 0, %s154
    %s169 = sphi 0, %s155
    %s175 = sphi 0, %s177
    %s178 = sphi 0, %s175
    %s179 = sphi 0, %s178
    %s195 = sphi 0, %s179
  $region4: #{run.3} parent=0 // loop_header_branch
    %16 = sbr.rel (%p14) target = $region8
  $region5: #{run.3} parent=0 // loop_body
    %s18 = ssub.s32 %s13, 1
    %s19 = ssub.s32 %s13, 2
    %s20 = sadd.s32 %s13, 1
    %s21 = ssub.s32 %s13, %s20
    %p22 = scmp.eq.s32.totalorder %s21, 0
    %s24 = sadd.s32 %s23, 1
    %s25 = scalar_select %p22, %s23, %s24
    %p28 = pneg %p22
    %p29 = scmp.eq.s32.totalorder %s13, 1
    %p30 = por %p28, %p29
    %p31 = scmp.ne.s32.totalorder %s23, %s26
    %p32 = scmp.eq.s32.totalorder %s13, 0
    %p33 = por %p31, %p32
    %p34 = scmp.ne.s32.totalorder %s23, %s26
    %p35 = scmp.eq.s32.totalorder %s18, 1
    %p36 = por %p34, %p35
    %p37 = scmp.ne.s32.totalorder %s26, %s27
    %p38 = scmp.eq.s32.totalorder %s18, 0
    %p39 = por %p37, %p38
    %p40 = scmp.ne.s32.totalorder %s26, %s27
    %p41 = scmp.eq.s32.totalorder %s19, 1
    %p42 = por %p40, %p41
    %p44 = scmp.ne.s32.totalorder %s27, %s43
    %p45 = scmp.eq.s32.totalorder %s19, 0
    %p46 = por %p44, %p45
    %s48 = sadd.s32 %s47, 1
    %p51 = scmp.eq.s32.totalorder %s13, 1
    %p52 = scmp.ne.s32.totalorder %s47, %s49
    %p53 = scmp.eq.s32.totalorder %s13, 0
    %p54 = por %p52, %p53
    %p55 = scmp.ne.s32.totalorder %s47, %s49
    %p56 = scmp.eq.s32.totalorder %s18, 1
    %p57 = por %p55, %p56
    %p58 = scmp.ne.s32.totalorder %s49, %s50
    %p59 = scmp.eq.s32.totalorder %s18, 0
    %p60 = por %p58, %p59
    %p61 = scmp.ne.s32.totalorder %s49, %s50
    %p62 = scmp.eq.s32.totalorder %s19, 1
    %p63 = por %p61, %p62
    %p65 = scmp.ne.s32.totalorder %s50, %s64
    %p66 = scmp.eq.s32.totalorder %s19, 0
    %p67 = por %p65, %p66
    %s69 = sadd.s32 %s68, 1
    %p72 = scmp.eq.s32.totalorder %s13, 1
    %p73 = scmp.ne.s32.totalorder %s68, %s70
    %p74 = scmp.eq.s32.totalorder %s13, 0
    %p75 = por %p73, %p74
    %p76 = scmp.ne.s32.totalorder %s68, %s70
    %p77 = scmp.eq.s32.totalorder %s18, 1
    %p78 = por %p76, %p77
    %p79 = scmp.ne.s32.totalorder %s70, %s71
    %p80 = scmp.eq.s32.totalorder %s18, 0
    %p81 = por %p79, %p80
    %p82 = scmp.ne.s32.totalorder %s70, %s71
    %p83 = scmp.eq.s32.totalorder %s19, 1
    %p84 = por %p82, %p83
    %p86 = scmp.ne.s32.totalorder %s71, %s85
    %p87 = scmp.eq.s32.totalorder %s19, 0
    %p88 = por %p86, %p87
    %s90 = sadd.s32 %s89, 1
    %p93 = scmp.eq.s32.totalorder %s13, 1
    %p94 = scmp.ne.s32.totalorder %s89, %s91
    %p95 = scmp.eq.s32.totalorder %s13, 0
    %p96 = por %p94, %p95
    %p97 = scmp.ne.s32.totalorder %s89, %s91
    %p98 = scmp.eq.s32.totalorder %s18, 1
    %p99 = por %p97, %p98
    %p100 = scmp.ne.s32.totalorder %s91, %s92
    %p101 = scmp.eq.s32.totalorder %s18, 0
    %p102 = por %p100, %p101
    %p103 = scmp.ne.s32.totalorder %s91, %s92
    %p104 = scmp.eq.s32.totalorder %s19, 1
    %p105 = por %p103, %p104
    %p107 = scmp.ne.s32.totalorder %s92, %s106
    %p108 = scmp.eq.s32.totalorder %s19, 0
    %p109 = por %p107, %p108
    %s111 = sadd.s32 %s110, 1
    %p114 = scmp.eq.s32.totalorder %s13, 1
    %p115 = scmp.ne.s32.totalorder %s110, %s112
    %p116 = scmp.eq.s32.totalorder %s13, 0
    %p117 = por %p115, %p116
    %p118 = scmp.ne.s32.totalorder %s110, %s112
    %p119 = scmp.eq.s32.totalorder %s18, 1
    %p120 = por %p118, %p119
    %p121 = scmp.ne.s32.totalorder %s112, %s113
    %p122 = scmp.eq.s32.totalorder %s18, 0
    %p123 = por %p121, %p122
    %p124 = scmp.ne.s32.totalorder %s112, %s113
    %p125 = scmp.eq.s32.totalorder %s19, 1
    %p126 = por %p124, %p125
    %p128 = scmp.ne.s32.totalorder %s113, %s127
    %p129 = scmp.eq.s32.totalorder %s19, 0
    %p130 = por %p128, %p129
    %s132 = sadd.s32 %s131, 1
    %p135 = scmp.eq.s32.totalorder %s13, 1
    %p136 = scmp.ne.s32.totalorder %s131, %s133
    %p137 = scmp.eq.s32.totalorder %s13, 0
    %p138 = por %p136, %p137
    %p139 = scmp.ne.s32.totalorder %s131, %s133
    %p140 = scmp.eq.s32.totalorder %s18, 1
    %p141 = por %p139, %p140
    %p142 = scmp.ne.s32.totalorder %s133, %s134
    %p143 = scmp.eq.s32.totalorder %s18, 0
    %p144 = por %p142, %p143
    %p145 = scmp.ne.s32.totalorder %s133, %s134
    %p146 = scmp.eq.s32.totalorder %s19, 1
    %p147 = por %p145, %p146
    %p149 = scmp.ne.s32.totalorder %s134, %s148
    %p150 = scmp.eq.s32.totalorder %s19, 0
    %p151 = por %p149, %p150
    %s153 = sadd.s32 %s152, 1
    %p156 = scmp.eq.s32.totalorder %s13, 1
    %p157 = scmp.ne.s32.totalorder %s152, %s154
    %p158 = scmp.eq.s32.totalorder %s13, 0
    %p159 = por %p157, %p158
    %p160 = scmp.ne.s32.totalorder %s152, %s154
    %p161 = scmp.eq.s32.totalorder %s18, 1
    %p162 = por %p160, %p161
    %p163 = scmp.ne.s32.totalorder %s154, %s155
    %p164 = scmp.eq.s32.totalorder %s18, 0
    %p165 = por %p163, %p164
    %p166 = scmp.ne.s32.totalorder %s154, %s155
    %p167 = scmp.eq.s32.totalorder %s19, 1
    %p168 = por %p166, %p167
    %p170 = scmp.ne.s32.totalorder %s155, %s169
    %p171 = scmp.eq.s32.totalorder %s19, 0
    %p172 = por %p170, %p171
    %s173 = ssub.s32 %s13, %s20
    %p174 = scmp.eq.s32.totalorder %s173, 0
    %s176 = sadd.s32 %s175, 1
    %s177 = scalar_select %p174, %s175, %s176
    %p180 = pneg %p174
    %p181 = scmp.eq.s32.totalorder %s13, 1
    %p182 = por %p180, %p181
    %p183 = scmp.ne.s32.totalorder %s175, %s178
    %p184 = scmp.eq.s32.totalorder %s13, 0
    %p185 = por %p183, %p184
    %p186 = scmp.ne.s32.totalorder %s175, %s178
    %p187 = scmp.eq.s32.totalorder %s18, 1
    %p188 = por %p186, %p187
    %p189 = scmp.ne.s32.totalorder %s178, %s179
    %p190 = scmp.eq.s32.totalorder %s18, 0
    %p191 = por %p189, %p190
    %p192 = scmp.ne.s32.totalorder %s178, %s179
    %p193 = scmp.eq.s32.totalorder %s19, 1
    %p194 = por %p192, %p193
    %p196 = scmp.ne.s32.totalorder %s179, %s195
    %p197 = scmp.eq.s32.totalorder %s19, 0
    %p198 = por %p196, %p197
    %p199 = scmp.le.s32.totalorder 1, %s13
    %p200 = scmp.lt.s32.totalorder %s13, 3
    %p201 = pnand %p199, %p200
    %p202 = pneg %p201
    // Predicated region
    $region9: #{run.3} parent=5 // pred_check
      _
    $region10: #{run.3} parent=5 // pred_check_branch
      %204 = sbr.rel (%p201) target = $region12
    $region11: #{run.3} parent=5 // pred_region
      %s205 = ssub.s32 %s13, 1
      // Predicated region
      $region13: #{run.3} parent=11 // pred_check
        %p206 = pneg %p60
      $region14: #{run.3} parent=11 // pred_check_branch
        %208 = sbr.rel (%p206) target = $region16
      $region15: #{run.3} parent=11 // pred_region
        _
      $region16: #{run.3} parent=11 // pred_fallthru
        _
      // Predicated region
      $region17: #{run.3} parent=11 // pred_check
        %p209 = pneg %p81
      $region18: #{run.3} parent=11 // pred_check_branch
        %211 = sbr.rel (%p209) target = $region20
      $region19: #{run.3} parent=11 // pred_region
        _
      $region20: #{run.3} parent=11 // pred_fallthru
        _
      // Predicated region
      $region21: #{run.3} parent=11 // pred_check
        %p212 = pneg %p102
      $region22: #{run.3} parent=11 // pred_check_branch
        %214 = sbr.rel (%p212) target = $region24
      $region23: #{run.3} parent=11 // pred_region
        _
      $region24: #{run.3} parent=11 // pred_fallthru
        _
      // Predicated region
      $region25: #{run.3} parent=11 // pred_check
        %p215 = pneg %p123
      $region26: #{run.3} parent=11 // pred_check_branch
        %217 = sbr.rel (%p215) target = $region28
      $region27: #{run.3} parent=11 // pred_region
        _
      $region28: #{run.3} parent=11 // pred_fallthru
        _
      // Predicated region
      $region29: #{run.3} parent=11 // pred_check
        %p218 = pneg %p144
      $region30: #{run.3} parent=11 // pred_check_branch
        %220 = sbr.rel (%p218) target = $region32
      $region31: #{run.3} parent=11 // pred_region
        _
      $region32: #{run.3} parent=11 // pred_fallthru
        _
      // Predicated region
      $region33: #{run.3} parent=11 // pred_check
        %p221 = pneg %p165
      $region34: #{run.3} parent=11 // pred_check_branch
        %223 = sbr.rel (%p221) target = $region36
      $region35: #{run.3} parent=11 // pred_region
        _
      $region36: #{run.3} parent=11 // pred_fallthru
        _
    $region12: #{run.3} parent=5 // pred_fallthru
      _
    %p224 = scmp.lt.s32.totalorder %s13, 2
    // Predicated region
    $region37: #{run.3} parent=5 // pred_check
      %p225 = pneg %p224
    $region38: #{run.3} parent=5 // pred_check_branch
      %227 = sbr.rel (%p225) target = $region40
    $region39: #{run.3} parent=5 // pred_region
      // Predicated region
      $region41: #{run.3} parent=39 // pred_check
        %p228 = pneg %p33
      $region42: #{run.3} parent=39 // pred_check_branch
        %230 = sbr.rel (%p228) target = $region44
      $region43: #{run.3} parent=39 // pred_region
        %p231 = scmp.lt.s32.totalorder %s13, 1
        %s232 = scalar_select %p231, %s13, 1
        %s233 = smul.addr %s232, 2
        %s234 = smul.addr %s233, 8
        %s235 = scalar_lea.vmem %s0, %s234
      $region44: #{run.3} parent=39 // pred_fallthru
        _
    $region40: #{run.3} parent=5 // pred_fallthru
      _
    %p236 = scmp.le.s32.totalorder 1, %s13
    %p237 = scmp.lt.s32.totalorder %s13, 3
    %p238 = pnand %p236, %p237
    %p239 = pneg %p238
    // Predicated region
    $region45: #{run.3} parent=5 // pred_check
      _
    $region46: #{run.3} parent=5 // pred_check_branch
      %241 = sbr.rel (%p238) target = $region48
    $region47: #{run.3} parent=5 // pred_region
      %s242 = ssub.s32 %s13, 1
      %p243 = scmp.lt.s32.totalorder %s18, 1
      %s244 = scalar_select %p243, %s18, 1
      %s245 = smul.addr %s244, 2
      %s246 = smul.addr %s245, 8
      %s247 = scalar_lea.vmem %s0, %s246
      %p248 = pneg %p39
      %p249 = pneg %p36
      %p250 = pneg %p60
      %p251 = pneg %p57
      %p252 = pneg %p81
      %p253 = pneg %p78
      %p254 = pneg %p102
      %p255 = pneg %p99
      %p256 = pneg %p123
      %p257 = pneg %p120
      %p258 = pneg %p144
      %p259 = pneg %p141
      %p260 = pneg %p165
      %p261 = pneg %p162
      %p262 = pneg %p191
      %p263 = pneg %p188
      %p264 = scmp.lt.s32.totalorder %s18, 1
      %s265 = scalar_select %p264, %s18, 1
      %s266 = smul.addr %s265, 8
      %s267 = scalar_lea.vmem %s7, %s266
      %p268 = scmp.lt.s32.totalorder %s18, 1
      %s269 = scalar_select %p268, %s18, 1
      %s270 = smul.addr %s269, 2
      %s271 = smul.addr %s270, 8
      %s272 = scalar_lea.vmem %s0, %s271
      %p273 = scmp.lt.s32.totalorder %s18, 1
      %s274 = scalar_select %p273, %s18, 1
      %s275 = smul.addr %s274, 8
      %s276 = scalar_lea.vmem %s7, %s275
      %v278 = vld [vmem:[%s272] sm:$0xff]
      %v279 = vld [vmem:[%s272 + $0x8] sm:$0xff]
      %v280 = vpack.c.bf16 %v279, %v278
      %v281 = vld [vmem:[%s1] sm:$0x3]
      %v282 = vld [vmem:[%s2] sm:$0x1]
      %v284 = vlaneseq
      %v285 = vshrl.u32 %v284, 7
      %v286 = vsub.s32 0, %v285
      %v287 = vrot.slane %v282, %v286
      %vm289 = vcmask 31744
      %v291 = vsel %vm289, %v280, 0
      %vm293 = vcmask 1041408
      %v295 = vsel %vm293, %v281, 0
      %297 = vmatprep.subr.bf16.mxu0 0
      %298 = vmatpush1.bf16.msra.mxu0 %v295
      %299 = vmatprep.subr.bf16.mxu0 0
      %300 = vmatpush1.bf16.msra.mxu0 0
      %301 = vmatprep.subr.bf16.mxu0 0
      %302 = vmatpush1.bf16.msra.mxu0 0
      %303 = vmatprep.subr.bf16.mxu0 0
      %304 = vmatpush1.bf16.msra.mxu0 0
      %305 = vmatprep.subr.bf16.mxu0 0
      %306 = vmatpush1.bf16.msra.mxu0 0
      %307 = vmatprep.subr.bf16.mxu0 0
      %308 = vmatpush1.bf16.msra.mxu0 0
      %309 = vmatprep.subr.bf16.mxu0 0
      %310 = vmatpush1.bf16.msra.mxu0 0
      %311 = vmatprep.subr.bf16.mxu0 0
      %312 = vmatpush1.bf16.msra.mxu0 0
      %313 = vmatprep.subr.bf16.mxu0 0
      %314 = vmatpush1.bf16.msra.mxu0 0
      %315 = vmatprep.subr.bf16.mxu0 0
      %316 = vmatpush1.bf16.msra.mxu0 0
      %317 = vmatprep.subr.bf16.mxu0 0
      %318 = vmatpush1.bf16.msra.mxu0 0
      %319 = vmatprep.subr.bf16.mxu0 0
      %320 = vmatpush1.bf16.msra.mxu0 0
      %321 = vmatprep.subr.bf16.mxu0 0
      %322 = vmatpush1.bf16.msra.mxu0 0
      %323 = vmatprep.subr.bf16.mxu0 0
      %324 = vmatpush1.bf16.msra.mxu0 0
      %325 = vmatprep.subr.bf16.mxu0 0
      %326 = vmatpush1.bf16.msra.mxu0 0
      %327 = vmatprep.subr.bf16.mxu0 0
      %328 = vmatpush1.bf16.msra.mxu0 0
      %329 = vmatprep.mubr.bf16.mxu0 0
      %330 = vmatmul.mubr.bf16.gmra.mrb[0].mxu0 %v291
      %v331 = vpop.f32.mrb[0].mxu0
      %v332 = vadd.f32 %v287, %v331
      %v333 = vpop.f32.mrb[0].mxu0
      %v334 = vpop.f32.mrb[0].mxu0
      %v335 = vadd.f32 %v287, %v334
      %v336 = vpop.f32.mrb[0].mxu0
      %337 = vdwg.mxu0
      %v338 = vmax.f32 %v332, 0.0
      %v339 = vmax.f32 %v335, 0.0
      %v340 = vmin.f32 %v338, 6.0
      %v341 = vmin.f32 %v339, 6.0
      %vm342 = vcmask 64512
      %343 = vst.msk [vmem:[#allocation2] sm:$0xff] %vm342, 0.0
      %344 = vst.msk [vmem:[#allocation2 + $0x8] sm:$0xff] %vm342, 0.0
      %vm345 = vcmask 58368
      %346 = vst.msk [vmem:[#allocation2 + $0x10] sm:$0x3] %vm345, 0.0
      %347 = vst.msk [vmem:[#allocation2 + $0x1] sm:$0xff] %vm342, %v340
      %348 = vst.msk [vmem:[#allocation2 + $0x9] sm:$0xff] %vm342, %v341
      %v349 = vld [vmem:[%s3] sm:$0x7]
      %v350 = vld [vmem:[#allocation2] ss:$2 sm:$0xff]
      %v351 = vlaneseq
      %v352 = vshrl.u32 %v351, 7
      %v353 = vsub.s32 0, %v352
      %v354 = vrot.slane %v349, %v353
      %v355 = vmul.f32 %v350, %v354
      %s356 = scalar_lea.vmem [#allocation2], 1
      %v357 = vld [vmem:[%s356] ss:$2 sm:$0xff]
      %v358 = vlaneseq
      %v359 = vshrl.u32 %v358, 7
      %v360 = vsub.s32 1, %v359
      %v361 = vrot.slane %v349, %v360
      %v362 = vmul.f32 %v357, %v361
      %v363 = vadd.f32 %v355, %v362
      %s364 = scalar_lea.vmem [#allocation2], 2
      %v365 = vld [vmem:[%s364] ss:$2 sm:$0xff]
      %v366 = vlaneseq
      %v367 = vshrl.u32 %v366, 7
      %v368 = vsub.s32 2, %v367
      %v369 = vrot.slane %v349, %v368
      %v370 = vmul.f32 %v365, %v369
      %v371 = vadd.f32 %v363, %v370
      %v372 = vld [vmem:[%s4] sm:$0x1]
      %v374 = vlaneseq
      %v375 = vshrl.u32 %v374, 7
      %v376 = vsub.s32 0, %v375
      %v377 = vrot.slane %v372, %v376
      %v379 = vadd.f32 %v371, %v377
      %v380 = vmax.f32 %v379, 0.0
      %v381 = vmin.f32 %v380, 6.0
      %v382 = vpack.c.bf16 %v381, %v381
      %v383 = vld [vmem:[%s5] sm:$0xf]
      %v384 = vld [vmem:[%s6] sm:$0x1]
      %v386 = vlaneseq
      %v387 = vshrl.u32 %v386, 7
      %v388 = vsub.s32 0, %v387
      %v389 = vrot.slane %v384, %v388
      %v392 = vsel %vm342, %v382, 0
      %vm394 = vcmask 1043456
      %v396 = vsel %vm394, %v383, 0
      %398 = vmatprep.subr.bf16.mxu0 0
      %399 = vmatpush1.bf16.msra.mxu0 %v396
      %400 = vmatprep.subr.bf16.mxu0 0
      %401 = vmatpush1.bf16.msra.mxu0 0
      %402 = vmatprep.subr.bf16.mxu0 0
      %403 = vmatpush1.bf16.msra.mxu0 0
      %404 = vmatprep.subr.bf16.mxu0 0
      %405 = vmatpush1.bf16.msra.mxu0 0
      %406 = vmatprep.subr.bf16.mxu0 0
      %407 = vmatpush1.bf16.msra.mxu0 0
      %408 = vmatprep.subr.bf16.mxu0 0
      %409 = vmatpush1.bf16.msra.mxu0 0
      %410 = vmatprep.subr.bf16.mxu0 0
      %411 = vmatpush1.bf16.msra.mxu0 0
      %412 = vmatprep.subr.bf16.mxu0 0
      %413 = vmatpush1.bf16.msra.mxu0 0
      %414 = vmatprep.subr.bf16.mxu0 0
      %415 = vmatpush1.bf16.msra.mxu0 0
      %416 = vmatprep.subr.bf16.mxu0 0
      %417 = vmatpush1.bf16.msra.mxu0 0
      %418 = vmatprep.subr.bf16.mxu0 0
      %419 = vmatpush1.bf16.msra.mxu0 0
      %420 = vmatprep.subr.bf16.mxu0 0
      %421 = vmatpush1.bf16.msra.mxu0 0
      %422 = vmatprep.subr.bf16.mxu0 0
      %423 = vmatpush1.bf16.msra.mxu0 0
      %424 = vmatprep.subr.bf16.mxu0 0
      %425 = vmatpush1.bf16.msra.mxu0 0
      %426 = vmatprep.subr.bf16.mxu0 0
      %427 = vmatpush1.bf16.msra.mxu0 0
      %428 = vmatprep.subr.bf16.mxu0 0
      %429 = vmatpush1.bf16.msra.mxu0 0
      %430 = vmatprep.mubr.bf16.mxu0 0
      %431 = vmatmul.mubr.bf16.gmra.mrb[0].mxu0 %v392
      %v432 = vpop.f32.mrb[0].mxu0
      %v433 = vadd.f32 %v389, %v432
      %v434 = vpop.f32.mrb[0].mxu0
      %v435 = vpop.f32.mrb[0].mxu0
      %v436 = vpop.f32.mrb[0].mxu0
      %437 = vdwg.mxu0
      %438 = vst.msk [vmem:[%s276] sm:$0xff] %vm342, %v433
      %p439 = scmp.lt.s32.totalorder %s18, 1
      %s440 = scalar_select %p439, %s18, 1
      %s441 = smul.addr %s440, 8
      %s442 = scalar_lea.vmem %s7, %s441
      // Predicated region
      $region49: #{run.3} parent=47 // pred_check
        %p443 = pneg %p188
      $region50: #{run.3} parent=47 // pred_check_branch
        %445 = sbr.rel (%p443) target = $region52
      $region51: #{run.3} parent=47 // pred_region
        _
      $region52: #{run.3} parent=47 // pred_fallthru
        _
    $region48: #{run.3} parent=5 // pred_fallthru
      _
    %p446 = scmp.le.s32.totalorder 2, %s13
    // Predicated region
    $region53: #{run.3} parent=5 // pred_check
      %p447 = pneg %p446
    $region54: #{run.3} parent=5 // pred_check_branch
      %449 = sbr.rel (%p447) target = $region56
    $region55: #{run.3} parent=5 // pred_region
      %s450 = ssub.s32 %s13, 2
      // Predicated region
      $region57: #{run.3} parent=55 // pred_check
        %p451 = pneg %p194
      $region58: #{run.3} parent=55 // pred_check_branch
        %453 = sbr.rel (%p451) target = $region60
      $region59: #{run.3} parent=55 // pred_region
        %p454 = scmp.lt.s32.totalorder %s19, 1
        %s455 = scalar_select %p454, %s19, 1
        %s456 = smul.addr %s455, 8
        %s457 = scalar_lea.vmem %s7, %s456
      $region60: #{run.3} parent=55 // pred_fallthru
        _
    $region56: #{run.3} parent=5 // pred_fallthru
      _
  $region6: #{run.3} parent=0 // loop_footer
    %s17 = sadd.s32 1, %s13
  $region7: #{run.3} parent=0 // loop_footer_branch
    %12 = sbr.rel target = $region3
  $region8: #{run.3} parent=0 // loop_exit
    _

// kernel: run.2
$region0: #{run.2}
  #allocation0 [shape = 'u32[]', space=smem, size = 0x4, offset = 0x4, fixed_abs, tag = 'smem constant byte address 0x4 - core index']
  #allocation1 [shape = 'u32[144,128]{1,0:T(1,128)}', space=vmem, size = 0x12000, scoped, tag = 'internal scratch']
  #allocation2 [shape = 'f32[18,8]{1,0:T(8,128)}', space=vmem, size = 0x3000, scoped, tag = 'scratch operand']
  %s0 = inlined_call_operand.vmem [shape: f32[2,16,4], index: 0, kind: input, shape index: {}]
  %s1 = inlined_call_operand.vmem [shape: bf16[4,8], index: 1, kind: input, shape index: {}]
  %s2 = inlined_call_operand.vmem [shape: f32[1,8], index: 2, kind: input, shape index: {}]
  %s3 = inlined_call_operand.vmem [shape: f32[3,8], index: 3, kind: input, shape index: {}]
  %s4 = inlined_call_operand.vmem [shape: f32[1,8], index: 4, kind: input, shape index: {}]
  %s5 = inlined_call_operand.vmem [shape: bf16[8,4], index: 5, kind: input, shape index: {}]
  %s6 = inlined_call_operand.vmem [shape: f32[1,4], index: 6, kind: input, shape index: {}]
  %s7 = inlined_call_operand.vmem [shape: f32[2,16,4], index: 7, kind: output, shape index: {}]
  %s8 = sld [smem:[#allocation0]]
  $region61: #{run.2} parent=0
    _
  %s10 = ssub.s32 1, %s8
  %s11 = scalar_select 0, %s10, %s8
  loop: start=0, step=1, limit=4
  $region2: #{run.2} parent=0 // loop_pre_header
    _
  $region3: #{run.2} parent=0 // loop_header
    %s13 = sphi 0, %s17
    %p14 = scmp.ge.s32.totalorder %s13, 4
    %s23 = sphi 0, %s25
    %s26 = sphi 0, %s23
    %s27 = sphi 0, %s26
    %s43 = sphi 0, %s27
    %s47 = sphi 0, %s47
    %s49 = sphi 0, %s47
    %s50 = sphi 0, %s49
    %s64 = sphi 0, %s50
    %s68 = sphi 0, %s68
    %s70 = sphi 0, %s68
    %s71 = sphi 0, %s70
    %s85 = sphi 0, %s71
    %s89 = sphi 0, %s89
    %s91 = sphi 0, %s89
    %s92 = sphi 0, %s91
    %s106 = sphi 0, %s92
    %s110 = sphi 0, %s110
    %s112 = sphi 0, %s110
    %s113 = sphi 0, %s112
    %s127 = sphi 0, %s113
    %s131 = sphi 0, %s131
    %s133 = sphi 0, %s131
    %s134 = sphi 0, %s133
    %s148 = sphi 0, %s134
    %s152 = sphi 0, %s152
    %s154 = sphi 0, %s152
    %s155 = sphi 0, %s154
    %s169 = sphi 0, %s155
    %s175 = sphi 0, %s177
    %s178 = sphi 0, %s175
    %s179 = sphi 0, %s178
    %s195 = sphi 0, %s179
  $region4: #{run.2} parent=0 // loop_header_branch
    %16 = sbr.rel (%p14) target = $region8
  $region5: #{run.2} parent=0 // loop_body
    %s18 = ssub.s32 %s13, 1
    %s19 = ssub.s32 %s13, 2
    %s20 = sadd.s32 %s13, 1
    %s21 = ssub.s32 %s13, %s20
    %p22 = scmp.eq.s32.totalorder %s21, 0
    %s24 = sadd.s32 %s23, 1
    %s25 = scalar_select %p22, %s23, %s24
    %p28 = pneg %p22
    %p29 = scmp.eq.s32.totalorder %s13, 1
    %p30 = por %p28, %p29
    %p31 = scmp.ne.s32.totalorder %s23, %s26
    %p32 = scmp.eq.s32.totalorder %s13, 0
    %p33 = por %p31, %p32
    %p34 = scmp.ne.s32.totalorder %s23, %s26
    %p35 = scmp.eq.s32.totalorder %s18, 1
    %p36 = por %p34, %p35
    %p37 = scmp.ne.s32.totalorder %s26, %s27
    %p38 = scmp.eq.s32.totalorder %s18, 0
    %p39 = por %p37, %p38
    %p40 = scmp.ne.s32.totalorder %s26, %s27
    %p41 = scmp.eq.s32.totalorder %s19, 1
    %p42 = por %p40, %p41
    %p44 = scmp.ne.s32.totalorder %s27, %s43
    %p45 = scmp.eq.s32.totalorder %s19, 0
    %p46 = por %p44, %p45
    %s48 = sadd.s32 %s47, 1
    %p51 = scmp.eq.s32.totalorder %s13, 1
    %p52 = scmp.ne.s32.totalorder %s47, %s49
    %p53 = scmp.eq.s32.totalorder %s13, 0
    %p54 = por %p52, %p53
    %p55 = scmp.ne.s32.totalorder %s47, %s49
    %p56 = scmp.eq.s32.totalorder %s18, 1
    %p57 = por %p55, %p56
    %p58 = scmp.ne.s32.totalorder %s49, %s50
    %p59 = scmp.eq.s32.totalorder %s18, 0
    %p60 = por %p58, %p59
    %p61 = scmp.ne.s32.totalorder %s49, %s50
    %p62 = scmp.eq.s32.totalorder %s19, 1
    %p63 = por %p61, %p62
    %p65 = scmp.ne.s32.totalorder %s50, %s64
    %p66 = scmp.eq.s32.totalorder %s19, 0
    %p67 = por %p65, %p66
    %s69 = sadd.s32 %s68, 1
    %p72 = scmp.eq.s32.totalorder %s13, 1
    %p73 = scmp.ne.s32.totalorder %s68, %s70
    %p74 = scmp.eq.s32.totalorder %s13, 0
    %p75 = por %p73, %p74
    %p76 = scmp.ne.s32.totalorder %s68, %s70
    %p77 = scmp.eq.s32.totalorder %s18, 1
    %p78 = por %p76, %p77
    %p79 = scmp.ne.s32.totalorder %s70, %s71
    %p80 = scmp.eq.s32.totalorder %s18, 0
    %p81 = por %p79, %p80
    %p82 = scmp.ne.s32.totalorder %s70, %s71
    %p83 = scmp.eq.s32.totalorder %s19, 1
    %p84 = por %p82, %p83
    %p86 = scmp.ne.s32.totalorder %s71, %s85
    %p87 = scmp.eq.s32.totalorder %s19, 0
    %p88 = por %p86, %p87
    %s90 = sadd.s32 %s89, 1
    %p93 = scmp.eq.s32.totalorder %s13, 1
    %p94 = scmp.ne.s32.totalorder %s89, %s91
    %p95 = scmp.eq.s32.totalorder %s13, 0
    %p96 = por %p94, %p95
    %p97 = scmp.ne.s32.totalorder %s89, %s91
    %p98 = scmp.eq.s32.totalorder %s18, 1
    %p99 = por %p97, %p98
    %p100 = scmp.ne.s32.totalorder %s91, %s92
    %p101 = scmp.eq.s32.totalorder %s18, 0
    %p102 = por %p100, %p101
    %p103 = scmp.ne.s32.totalorder %s91, %s92
    %p104 = scmp.eq.s32.totalorder %s19, 1
    %p105 = por %p103, %p104
    %p107 = scmp.ne.s32.totalorder %s92, %s106
    %p108 = scmp.eq.s32.totalorder %s19, 0
    %p109 = por %p107, %p108
    %s111 = sadd.s32 %s110, 1
    %p114 = scmp.eq.s32.totalorder %s13, 1
    %p115 = scmp.ne.s32.totalorder %s110, %s112
    %p116 = scmp.eq.s32.totalorder %s13, 0
    %p117 = por %p115, %p116
    %p118 = scmp.ne.s32.totalorder %s110, %s112
    %p119 = scmp.eq.s32.totalorder %s18, 1
    %p120 = por %p118, %p119
    %p121 = scmp.ne.s32.totalorder %s112, %s113
    %p122 = scmp.eq.s32.totalorder %s18, 0
    %p123 = por %p121, %p122
    %p124 = scmp.ne.s32.totalorder %s112, %s113
    %p125 = scmp.eq.s32.totalorder %s19, 1
    %p126 = por %p124, %p125
    %p128 = scmp.ne.s32.totalorder %s113, %s127
    %p129 = scmp.eq.s32.totalorder %s19, 0
    %p130 = por %p128, %p129
    %s132 = sadd.s32 %s131, 1
    %p135 = scmp.eq.s32.totalorder %s13, 1
    %p136 = scmp.ne.s32.totalorder %s131, %s133
    %p137 = scmp.eq.s32.totalorder %s13, 0
    %p138 = por %p136, %p137
    %p139 = scmp.ne.s32.totalorder %s131, %s133
    %p140 = scmp.eq.s32.totalorder %s18, 1
    %p141 = por %p139, %p140
    %p142 = scmp.ne.s32.totalorder %s133, %s134
    %p143 = scmp.eq.s32.totalorder %s18, 0
    %p144 = por %p142, %p143
    %p145 = scmp.ne.s32.totalorder %s133, %s134
    %p146 = scmp.eq.s32.totalorder %s19, 1
    %p147 = por %p145, %p146
    %p149 = scmp.ne.s32.totalorder %s134, %s148
    %p150 = scmp.eq.s32.totalorder %s19, 0
    %p151 = por %p149, %p150
    %s153 = sadd.s32 %s152, 1
    %p156 = scmp.eq.s32.totalorder %s13, 1
    %p157 = scmp.ne.s32.totalorder %s152, %s154
    %p158 = scmp.eq.s32.totalorder %s13, 0
    %p159 = por %p157, %p158
    %p160 = scmp.ne.s32.totalorder %s152, %s154
    %p161 = scmp.eq.s32.totalorder %s18, 1
    %p162 = por %p160, %p161
    %p163 = scmp.ne.s32.totalorder %s154, %s155
    %p164 = scmp.eq.s32.totalorder %s18, 0
    %p165 = por %p163, %p164
    %p166 = scmp.ne.s32.totalorder %s154, %s155
    %p167 = scmp.eq.s32.totalorder %s19, 1
    %p168 = por %p166, %p167
    %p170 = scmp.ne.s32.totalorder %s155, %s169
    %p171 = scmp.eq.s32.totalorder %s19, 0
    %p172 = por %p170, %p171
    %s173 = ssub.s32 %s13, %s20
    %p174 = scmp.eq.s32.totalorder %s173, 0
    %s176 = sadd.s32 %s175, 1
    %s177 = scalar_select %p174, %s175, %s176
    %p180 = pneg %p174
    %p181 = scmp.eq.s32.totalorder %s13, 1
    %p182 = por %p180, %p181
    %p183 = scmp.ne.s32.totalorder %s175, %s178
    %p184 = scmp.eq.s32.totalorder %s13, 0
    %p185 = por %p183, %p184
    %p186 = scmp.ne.s32.totalorder %s175, %s178
    %p187 = scmp.eq.s32.totalorder %s18, 1
    %p188 = por %p186, %p187
    %p189 = scmp.ne.s32.totalorder %s178, %s179
    %p190 = scmp.eq.s32.totalorder %s18, 0
    %p191 = por %p189, %p190
    %p192 = scmp.ne.s32.totalorder %s178, %s179
    %p193 = scmp.eq.s32.totalorder %s19, 1
    %p194 = por %p192, %p193
    %p196 = scmp.ne.s32.totalorder %s179, %s195
    %p197 = scmp.eq.s32.totalorder %s19, 0
    %p198 = por %p196, %p197
    %p199 = scmp.le.s32.totalorder 1, %s13
    %p200 = scmp.lt.s32.totalorder %s13, 3
    %p201 = pnand %p199, %p200
    %p202 = pneg %p201
    // Predicated region
    $region9: #{run.2} parent=5 // pred_check
      _
    $region10: #{run.2} parent=5 // pred_check_branch
      %204 = sbr.rel (%p201) target = $region12
    $region11: #{run.2} parent=5 // pred_region
      %s205 = ssub.s32 %s13, 1
      // Predicated region
      $region13: #{run.2} parent=11 // pred_check
        %p206 = pneg %p60
      $region14: #{run.2} parent=11 // pred_check_branch
        %208 = sbr.rel (%p206) target = $region16
      $region15: #{run.2} parent=11 // pred_region
        _
      $region16: #{run.2} parent=11 // pred_fallthru
        _
      // Predicated region
      $region17: #{run.2} parent=11 // pred_check
        %p209 = pneg %p81
      $region18: #{run.2} parent=11 // pred_check_branch
        %211 = sbr.rel (%p209) target = $region20
      $region19: #{run.2} parent=11 // pred_region
        _
      $region20: #{run.2} parent=11 // pred_fallthru
        _
      // Predicated region
      $region21: #{run.2} parent=11 // pred_check
        %p212 = pneg %p102
      $region22: #{run.2} parent=11 // pred_check_branch
        %214 = sbr.rel (%p212) target = $region24
      $region23: #{run.2} parent=11 // pred_region
        _
      $region24: #{run.2} parent=11 // pred_fallthru
        _
      // Predicated region
      $region25: #{run.2} parent=11 // pred_check
        %p215 = pneg %p123
      $region26: #{run.2} parent=11 // pred_check_branch
        %217 = sbr.rel (%p215) target = $region28
      $region27: #{run.2} parent=11 // pred_region
        _
      $region28: #{run.2} parent=11 // pred_fallthru
        _
      // Predicated region
      $region29: #{run.2} parent=11 // pred_check
        %p218 = pneg %p144
      $region30: #{run.2} parent=11 // pred_check_branch
        %220 = sbr.rel (%p218) target = $region32
      $region31: #{run.2} parent=11 // pred_region
        _
      $region32: #{run.2} parent=11 // pred_fallthru
        _
      // Predicated region
      $region33: #{run.2} parent=11 // pred_check
        %p221 = pneg %p165
      $region34: #{run.2} parent=11 // pred_check_branch
        %223 = sbr.rel (%p221) target = $region36
      $region35: #{run.2} parent=11 // pred_region
        _
      $region36: #{run.2} parent=11 // pred_fallthru
        _
    $region12: #{run.2} parent=5 // pred_fallthru
      _
    %p224 = scmp.lt.s32.totalorder %s13, 2
    // Predicated region
    $region37: #{run.2} parent=5 // pred_check
      %p225 = pneg %p224
    $region38: #{run.2} parent=5 // pred_check_branch
      %227 = sbr.rel (%p225) target = $region40
    $region39: #{run.2} parent=5 // pred_region
      // Predicated region
      $region41: #{run.2} parent=39 // pred_check
        %p228 = pneg %p33
      $region42: #{run.2} parent=39 // pred_check_branch
        %230 = sbr.rel (%p228) target = $region44
      $region43: #{run.2} parent=39 // pred_region
        %p231 = scmp.lt.s32.totalorder %s13, 1
        %s232 = scalar_select %p231, %s13, 1
        %s233 = smul.addr %s232, 2
        %s234 = smul.addr %s233, 8
        %s235 = scalar_lea.vmem %s0, %s234
      $region44: #{run.2} parent=39 // pred_fallthru
        _
    $region40: #{run.2} parent=5 // pred_fallthru
      _
    %p236 = scmp.le.s32.totalorder 1, %s13
    %p237 = scmp.lt.s32.totalorder %s13, 3
    %p238 = pnand %p236, %p237
    %p239 = pneg %p238
    // Predicated region
    $region45: #{run.2} parent=5 // pred_check
      _
    $region46: #{run.2} parent=5 // pred_check_branch
      %241 = sbr.rel (%p238) target = $region48
    $region47: #{run.2} parent=5 // pred_region
      %s242 = ssub.s32 %s13, 1
      %p243 = scmp.lt.s32.totalorder %s18, 1
      %s244 = scalar_select %p243, %s18, 1
      %s245 = smul.addr %s244, 2
      %s246 = smul.addr %s245, 8
      %s247 = scalar_lea.vmem %s0, %s246
      %p248 = pneg %p39
      %p249 = pneg %p36
      %p250 = pneg %p60
      %p251 = pneg %p57
      %p252 = pneg %p81
      %p253 = pneg %p78
      %p254 = pneg %p102
      %p255 = pneg %p99
      %p256 = pneg %p123
      %p257 = pneg %p120
      %p258 = pneg %p144
      %p259 = pneg %p141
      %p260 = pneg %p165
      %p261 = pneg %p162
      %p262 = pneg %p191
      %p263 = pneg %p188
      %p264 = scmp.lt.s32.totalorder %s18, 1
      %s265 = scalar_select %p264, %s18, 1
      %s266 = smul.addr %s265, 2
      %s267 = smul.addr %s266, 8
      %s268 = scalar_lea.vmem %s7, %s267
      %p269 = scmp.lt.s32.totalorder %s18, 1
      %s270 = scalar_select %p269, %s18, 1
      %s271 = smul.addr %s270, 2
      %s272 = smul.addr %s271, 8
      %s273 = scalar_lea.vmem %s0, %s272
      %p274 = scmp.lt.s32.totalorder %s18, 1
      %s275 = scalar_select %p274, %s18, 1
      %s276 = smul.addr %s275, 2
      %s277 = smul.addr %s276, 8
      %s278 = scalar_lea.vmem %s7, %s277
      %v280 = vld [vmem:[%s273] sm:$0xff]
      %v281 = vld [vmem:[%s273 + $0x8] sm:$0xff]
      %v282 = vpack.c.bf16 %v281, %v280
      %v283 = vld [vmem:[%s1] sm:$0x3]
      %v284 = vld [vmem:[%s2] sm:$0x1]
      %v286 = vlaneseq
      %v287 = vshrl.u32 %v286, 7
      %v288 = vsub.s32 0, %v287
      %v289 = vrot.slane %v284, %v288
      %vm291 = vcmask 31744
      %v293 = vsel %vm291, %v282, 0
      %vm295 = vcmask 1041408
      %v297 = vsel %vm295, %v283, 0
      %299 = vmatprep.subr.bf16.mxu0 0
      %300 = vmatpush1.bf16.msra.mxu0 %v297
      %301 = vmatprep.subr.bf16.mxu0 0
      %302 = vmatpush1.bf16.msra.mxu0 0
      %303 = vmatprep.subr.bf16.mxu0 0
      %304 = vmatpush1.bf16.msra.mxu0 0
      %305 = vmatprep.subr.bf16.mxu0 0
      %306 = vmatpush1.bf16.msra.mxu0 0
      %307 = vmatprep.subr.bf16.mxu0 0
      %308 = vmatpush1.bf16.msra.mxu0 0
      %309 = vmatprep.subr.bf16.mxu0 0
      %310 = vmatpush1.bf16.msra.mxu0 0
      %311 = vmatprep.subr.bf16.mxu0 0
      %312 = vmatpush1.bf16.msra.mxu0 0
      %313 = vmatprep.subr.bf16.mxu0 0
      %314 = vmatpush1.bf16.msra.mxu0 0
      %315 = vmatprep.subr.bf16.mxu0 0
      %316 = vmatpush1.bf16.msra.mxu0 0
      %317 = vmatprep.subr.bf16.mxu0 0
      %318 = vmatpush1.bf16.msra.mxu0 0
      %319 = vmatprep.subr.bf16.mxu0 0
      %320 = vmatpush1.bf16.msra.mxu0 0
      %321 = vmatprep.subr.bf16.mxu0 0
      %322 = vmatpush1.bf16.msra.mxu0 0
      %323 = vmatprep.subr.bf16.mxu0 0
      %324 = vmatpush1.bf16.msra.mxu0 0
      %325 = vmatprep.subr.bf16.mxu0 0
      %326 = vmatpush1.bf16.msra.mxu0 0
      %327 = vmatprep.subr.bf16.mxu0 0
      %328 = vmatpush1.bf16.msra.mxu0 0
      %329 = vmatprep.subr.bf16.mxu0 0
      %330 = vmatpush1.bf16.msra.mxu0 0
      %331 = vmatprep.mubr.bf16.mxu0 0
      %332 = vmatmul.mubr.bf16.gmra.mrb[0].mxu0 %v293
      %v333 = vpop.f32.mrb[0].mxu0
      %v334 = vadd.f32 %v289, %v333
      %v335 = vpop.f32.mrb[0].mxu0
      %v336 = vpop.f32.mrb[0].mxu0
      %v337 = vadd.f32 %v289, %v336
      %v338 = vpop.f32.mrb[0].mxu0
      %339 = vdwg.mxu0
      %v340 = vmax.f32 %v334, 0.0
      %v341 = vmax.f32 %v337, 0.0
      %v342 = vmin.f32 %v340, 6.0
      %v343 = vmin.f32 %v341, 6.0
      %vm344 = vcmask 64512
      %345 = vst.msk [vmem:[#allocation2] sm:$0xff] %vm344, 0.0
      %346 = vst.msk [vmem:[#allocation2 + $0x8] sm:$0xff] %vm344, 0.0
      %vm347 = vcmask 58368
      %348 = vst.msk [vmem:[#allocation2 + $0x10] sm:$0x3] %vm347, 0.0
      %349 = vst.msk [vmem:[#allocation2 + $0x1] sm:$0xff] %vm344, %v342
      %350 = vst.msk [vmem:[#allocation2 + $0x9] sm:$0xff] %vm344, %v343
      %v351 = vld [vmem:[%s3] sm:$0x7]
      %v352 = vld [vmem:[#allocation2] sm:$0xff]
      %v353 = vld [vmem:[#allocation2 + $0x8] sm:$0xff]
      %v354 = vlaneseq
      %v355 = vshrl.u32 %v354, 7
      %v356 = vsub.s32 0, %v355
      %v357 = vrot.slane %v351, %v356
      %v358 = vmul.f32 %v352, %v357
      %v359 = vmul.f32 %v353, %v357
      %v360 = vld [vmem:[#allocation2 + $0x1] sm:$0xff]
      %v361 = vld [vmem:[#allocation2 + $0x9] sm:$0xff]
      %v362 = vlaneseq
      %v363 = vshrl.u32 %v362, 7
      %v364 = vsub.s32 1, %v363
      %v365 = vrot.slane %v351, %v364
      %v366 = vmul.f32 %v360, %v365
      %v367 = vmul.f32 %v361, %v365
      %v368 = vadd.f32 %v358, %v366
      %v369 = vadd.f32 %v359, %v367
      %v370 = vld [vmem:[#allocation2 + $0x2] sm:$0xff]
      %v371 = vld [vmem:[#allocation2 + $0xa] sm:$0xff]
      %v372 = vlaneseq
      %v373 = vshrl.u32 %v372, 7
      %v374 = vsub.s32 2, %v373
      %v375 = vrot.slane %v351, %v374
      %v376 = vmul.f32 %v370, %v375
      %v377 = vmul.f32 %v371, %v375
      %v378 = vadd.f32 %v368, %v376
      %v379 = vadd.f32 %v369, %v377
      %v380 = vld [vmem:[%s4] sm:$0x1]
      %v382 = vlaneseq
      %v383 = vshrl.u32 %v382, 7
      %v384 = vsub.s32 0, %v383
      %v385 = vrot.slane %v380, %v384
      %v387 = vadd.f32 %v378, %v385
      %v388 = vadd.f32 %v379, %v385
      %v389 = vmax.f32 %v387, 0.0
      %v390 = vmax.f32 %v388, 0.0
      %v391 = vmin.f32 %v389, 6.0
      %v392 = vmin.f32 %v390, 6.0
      %v393 = vpack.c.bf16 %v392, %v391
      %v394 = vld [vmem:[%s5] sm:$0xf]
      %v395 = vld [vmem:[%s6] sm:$0x1]
      %v397 = vlaneseq
      %v398 = vshrl.u32 %v397, 7
      %v399 = vsub.s32 0, %v398
      %v400 = vrot.slane %v395, %v399
      %v403 = vsel %vm344, %v393, 0
      %vm405 = vcmask 1043456
      %v407 = vsel %vm405, %v394, 0
      %409 = vmatprep.subr.bf16.mxu0 0
      %410 = vmatpush1.bf16.msra.mxu0 %v407
      %411 = vmatprep.subr.bf16.mxu0 0
      %412 = vmatpush1.bf16.msra.mxu0 0
      %413 = vmatprep.subr.bf16.mxu0 0
      %414 = vmatpush1.bf16.msra.mxu0 0
      %415 = vmatprep.subr.bf16.mxu0 0
      %416 = vmatpush1.bf16.msra.mxu0 0
      %417 = vmatprep.subr.bf16.mxu0 0
      %418 = vmatpush1.bf16.msra.mxu0 0
      %419 = vmatprep.subr.bf16.mxu0 0
      %420 = vmatpush1.bf16.msra.mxu0 0
      %421 = vmatprep.subr.bf16.mxu0 0
      %422 = vmatpush1.bf16.msra.mxu0 0
      %423 = vmatprep.subr.bf16.mxu0 0
      %424 = vmatpush1.bf16.msra.mxu0 0
      %425 = vmatprep.subr.bf16.mxu0 0
      %426 = vmatpush1.bf16.msra.mxu0 0
      %427 = vmatprep.subr.bf16.mxu0 0
      %428 = vmatpush1.bf16.msra.mxu0 0
      %429 = vmatprep.subr.bf16.mxu0 0
      %430 = vmatpush1.bf16.msra.mxu0 0
      %431 = vmatprep.subr.bf16.mxu0 0
      %432 = vmatpush1.bf16.msra.mxu0 0
      %433 = vmatprep.subr.bf16.mxu0 0
      %434 = vmatpush1.bf16.msra.mxu0 0
      %435 = vmatprep.subr.bf16.mxu0 0
      %436 = vmatpush1.bf16.msra.mxu0 0
      %437 = vmatprep.subr.bf16.mxu0 0
      %438 = vmatpush1.bf16.msra.mxu0 0
      %439 = vmatprep.subr.bf16.mxu0 0
      %440 = vmatpush1.bf16.msra.mxu0 0
      %441 = vmatprep.mubr.bf16.mxu0 0
      %442 = vmatmul.mubr.bf16.gmra.mrb[0].mxu0 %v403
      %v443 = vpop.f32.mrb[0].mxu0
      %v444 = vadd.f32 %v400, %v443
      %v445 = vpop.f32.mrb[0].mxu0
      %v446 = vpop.f32.mrb[0].mxu0
      %v447 = vadd.f32 %v400, %v446
      %v448 = vpop.f32.mrb[0].mxu0
      %449 = vdwg.mxu0
      %v450 = vadd.f32 %v444, %v280
      %v451 = vadd.f32 %v447, %v281
      %452 = vst.msk [vmem:[%s278] sm:$0xff] %vm291, %v450
      %453 = vst.msk [vmem:[%s278 + $0x8] sm:$0xff] %vm291, %v451
      %p454 = scmp.lt.s32.totalorder %s18, 1
      %s455 = scalar_select %p454, %s18, 1
      %s456 = smul.addr %s455, 2
      %s457 = smul.addr %s456, 8
      %s458 = scalar_lea.vmem %s7, %s457
      // Predicated region
      $region49: #{run.2} parent=47 // pred_check
        %p459 = pneg %p188
      $region50: #{run.2} parent=47 // pred_check_branch
        %461 = sbr.rel (%p459) target = $region52
      $region51: #{run.2} parent=47 // pred_region
        _
      $region52: #{run.2} parent=47 // pred_fallthru
        _
    $region48: #{run.2} parent=5 // pred_fallthru
      _
    %p462 = scmp.le.s32.totalorder 2, %s13
    // Predicated region
    $region53: #{run.2} parent=5 // pred_check
      %p463 = pneg %p462
    $region54: #{run.2} parent=5 // pred_check_branch
      %465 = sbr.rel (%p463) target = $region56
    $region55: #{run.2} parent=5 // pred_region
      %s466 = ssub.s32 %s13, 2
      // Predicated region
      $region57: #{run.2} parent=55 // pred_check
        %p467 = pneg %p194
      $region58: #{run.2} parent=55 // pred_check_branch
        %469 = sbr.rel (%p467) target = $region60
      $region59: #{run.2} parent=55 // pred_region
        %p470 = scmp.lt.s32.totalorder %s19, 1
        %s471 = scalar_select %p470, %s19, 1
        %s472 = smul.addr %s471, 2
        %s473 = smul.addr %s472, 8
        %s474 = scalar_lea.vmem %s7, %s473
      $region60: #{run.2} parent=55 // pred_fallthru
        _
    $region56: #{run.2} parent=5 // pred_fallthru
      _
  $region6: #{run.2} parent=0 // loop_footer
    %s17 = sadd.s32 1, %s13
  $region7: #{run.2} parent=0 // loop_footer_branch
    %12 = sbr.rel target = $region3
  $region8: #{run.2} parent=0 // loop_exit
    _

</llo_original>
